<compile_context>
chip_gen: v7x
topology: tpu7x:2x2x1
jax: 0.10.0
libtpu: 0.0.40
codegen_flags: <defaults>
</compile_context>

<pallas_src>
import math

import jax
import jax.numpy as jnp
from jax.experimental import pallas as pl
from jax.experimental.pallas import tpu as pltpu

_LANE = 128
_SMOOTH = 1.0


def _dice_partial_kernel(x_ref, t_ref, inter_ref, sq_ref):
    """Accumulate lane-wise partial sums for one (split, k) grid step.

    x_ref, t_ref      : (R, TN) VMEM tiles of the flattened, padded inputs.
    inter_ref, sq_ref : (R, 128) f32 output blocks, resident across the k
                        (reduction) axis; hold per-row per-lane partial sums of
                        x*t and (x+t)^2 respectively.
    """
    k = pl.program_id(1)

    @pl.when(k == 0)
    def _():
        inter_ref[...] = jnp.zeros_like(inter_ref)
        sq_ref[...] = jnp.zeros_like(sq_ref)

    tn = x_ref.shape[1]
    n_chunks = tn // _LANE

    i_acc = inter_ref[...]
    s_acc = sq_ref[...]
    # Static, lane-aligned 128-wide chunks: pure VALU work, no cross-lane XLU
    # reduce and no relayout. (x+t)^2 = x^2 + t^2 + 2*x*t, so the union is
    # recovered in the wrapper as sq_sum - 2*intersect (saves one mul/element).
    for c in range(n_chunks):
        sl = slice(c * _LANE, (c + 1) * _LANE)
        xs = x_ref[:, sl].astype(jnp.float32)
        ts = t_ref[:, sl].astype(jnp.float32)
        i_acc = i_acc + xs * ts
        s = xs + ts
        s_acc = s_acc + s * s
    inter_ref[...] = i_acc
    sq_ref[...] = s_acc


def _round_up(x, m):
    return ((x + m - 1) // m) * m


def _choose_layout(B, N, *, num_splits, lane_tile_max=4096,
                   target_block_bytes=2 * 1024 * 1024):
    """Pick (G rows-per-batch, R total rows, tile width TN, K steps per split)."""
    # Minimal row replication that makes the row count a multiple of 8
    # (full sublane occupancy in every vreg).
    g = 8 // math.gcd(B, 8)
    # Grow the row count until a <=lane_tile_max-wide f32 tile reaches the
    # target block size (~2 MiB), as long as each split still sees at least one
    # full 128-lane chunk of real data per row (keeps padding bounded).
    while (B * g * lane_tile_max * 4 < target_block_bytes
           and 2 * g * num_splits * _LANE <= N):
        g *= 2
    R = B * g
    cols_per_split = pl.cdiv(N, g * num_splits)  # real columns per row per split
    tn = target_block_bytes // (R * 4)
    tn = min(tn, lane_tile_max, _round_up(cols_per_split, _LANE))
    tn = max(_LANE, (tn // _LANE) * _LANE)
    K = pl.cdiv(cols_per_split, tn)
    return g, R, tn, K


def dice_loss(x, target, *, num_splits=2):
    """Pallas implementation of DiceLoss.forward (returns a scalar)."""
    assert x.shape == target.shape
    assert x.ndim >= 2
    B = x.shape[0]
    N = 1
    for d in x.shape[1:]:
        N *= d

    G, R, TN, K = _choose_layout(B, N, num_splits=num_splits)
    M = num_splits * K * TN          # padded columns per row
    N_pad = G * M                    # padded features per batch element

    xf = x.reshape(B, N)
    tf = target.reshape(B, N)
    if N_pad > N:                    # zero padding contributes 0 to all sums
        pad = ((0, 0), (0, N_pad - N))
        xf = jnp.pad(xf, pad)
        tf = jnp.pad(tf, pad)
    xr = xf.reshape(R, M)
    tr = tf.reshape(R, M)

    in_spec = pl.BlockSpec((R, TN), lambda p, k: (0, p * K + k))
    out_spec = pl.BlockSpec((None, R, _LANE), lambda p, k: (p, 0, 0))

    inter, sq = pl.pallas_call(
        _dice_partial_kernel,
        out_shape=(
            jax.ShapeDtypeStruct((num_splits, R, _LANE), jnp.float32),
            jax.ShapeDtypeStruct((num_splits, R, _LANE), jnp.float32),
        ),
        grid_spec=pltpu.PrefetchScalarGridSpec(
            num_scalar_prefetch=0,
            grid=(num_splits, K),
            in_specs=[in_spec, in_spec],
            out_specs=(out_spec, out_spec),
        ),
        compiler_params=pltpu.CompilerParams(
            dimension_semantics=("parallel", "arbitrary"),
            vmem_limit_bytes=32 * 1024 * 1024,
        ),
    )(xr, tr)

    # Tiny finalization (glue): fold splits, lanes and row-groups, then dice.
    inter_b = inter.sum(axis=(0, 2)).reshape(B, G).sum(axis=1)   # sum(x*t)
    sq_b = sq.sum(axis=(0, 2)).reshape(B, G).sum(axis=1)         # sum((x+t)^2)
    union_b = sq_b - 2.0 * inter_b                               # sum(x^2)+sum(t^2)
    loss = 1.0 - (2.0 * inter_b + _SMOOTH) / (union_b + _SMOOTH)
    return jnp.mean(loss)


def dice_loss_ref(x, target):
    """Pure-JAX reference mirroring the PyTorch module."""
    axes = tuple(range(1, x.ndim))
    intersect = jnp.sum(x * target, axis=axes)
    union = jnp.sum(x * x, axis=axes) + jnp.sum(target * target, axis=axes)
    loss = 1.0 - (2.0 * intersect + 1.0) / (union + 1.0)
    return jnp.mean(loss)


if __name__ == "__main__":
    key = jax.random.PRNGKey(0)
    k1, k2 = jax.random.split(key)

    B, C, H, W = 2, 4, 16, 16  # NCHW, consistent with the PyTorch module
    x = jax.nn.sigmoid(jax.random.normal(k1, (B, C, H, W), dtype=jnp.float32))
    target = (jax.random.uniform(k2, (B, C, H, W)) > 0.5).astype(jnp.float32)

    out = dice_loss(x, target)
    jax.block_until_ready(out)

    ref = dice_loss_ref(x, target)
    assert jnp.allclose(out, ref, rtol=1e-5, atol=1e-5), (out, ref)

    print("KERNEL_OK")
</pallas_src>

<mosaic_0001>
module attributes {stable_mosaic.version = 11 : i64} {
  func.func @_dice_partial_kernel(%arg0: i32, %arg1: i32, %arg2: memref<8x128xf32, #tpu.memory_space<vmem>>, %arg3: memref<8x128xf32, #tpu.memory_space<vmem>>, %arg4: memref<1x8x128xf32, #tpu.memory_space<vmem>>, %arg5: memref<1x8x128xf32, #tpu.memory_space<vmem>>) attributes {dimension_semantics = [#tpu.dimension_semantics<parallel>, #tpu.dimension_semantics<arbitrary>], iteration_bounds = array<i64: 2, 1>, scalar_prefetch = 0 : i64, scratch_operands = 0 : i64, tpu.core_type = #tpu.core_type<tc>, window_params = [{transform_indices = @transform_0, window_bounds = array<i64: 8, 128>}, {transform_indices = @transform_1, window_bounds = array<i64: 8, 128>}, {transform_indices = @transform_2, window_bounds = array<i64: 1, 8, 128>}, {transform_indices = @transform_3, window_bounds = array<i64: 1, 8, 128>}]} {
    %c0_i32 = arith.constant 0 : i32
    %0 = arith.cmpi eq, %arg1, %c0_i32 : i32
    %1 = arith.extui %0 : i1 to i32
    %c0_i32_0 = arith.constant 0 : i32
    %2 = arith.cmpi ne, %1, %c0_i32_0 : i32
    scf.if %2 {
      %cst = arith.constant 0.000000e+00 : f32
      %20 = vector.broadcast %cst : f32 to vector<8x128xf32>
      %c0_16 = arith.constant 0 : index
      %c0_17 = arith.constant 0 : index
      %c0_18 = arith.constant 0 : index
      %21 = vector.load %arg4[%c0_16, %c0_17, %c0_18] : memref<1x8x128xf32, #tpu.memory_space<vmem>>, vector<1x8x128xf32>
      %22 = vector.shape_cast %21 : vector<1x8x128xf32> to vector<8x128xf32>
      %23 = vector.shape_cast %20 : vector<8x128xf32> to vector<1x8x128xf32>
      tpu.vector_store %arg4[%c0_16, %c0_17, %c0_18], %23 {strides = array<i32>} : memref<1x8x128xf32, #tpu.memory_space<vmem>>, vector<1x8x128xf32>,
      %cst_19 = arith.constant 0.000000e+00 : f32
      %24 = vector.broadcast %cst_19 : f32 to vector<8x128xf32>
      %c0_20 = arith.constant 0 : index
      %c0_21 = arith.constant 0 : index
      %c0_22 = arith.constant 0 : index
      %25 = vector.load %arg5[%c0_20, %c0_21, %c0_22] : memref<1x8x128xf32, #tpu.memory_space<vmem>>, vector<1x8x128xf32>
      %26 = vector.shape_cast %25 : vector<1x8x128xf32> to vector<8x128xf32>
      %27 = vector.shape_cast %24 : vector<8x128xf32> to vector<1x8x128xf32>
      tpu.vector_store %arg5[%c0_20, %c0_21, %c0_22], %27 {strides = array<i32>} : memref<1x8x128xf32, #tpu.memory_space<vmem>>, vector<1x8x128xf32>,
    } else {
    }
    %c0 = arith.constant 0 : index
    %c0_1 = arith.constant 0 : index
    %c0_2 = arith.constant 0 : index
    %3 = vector.load %arg4[%c0, %c0_1, %c0_2] : memref<1x8x128xf32, #tpu.memory_space<vmem>>, vector<1x8x128xf32>
    %4 = vector.shape_cast %3 : vector<1x8x128xf32> to vector<8x128xf32>
    %c0_3 = arith.constant 0 : index
    %c0_4 = arith.constant 0 : index
    %c0_5 = arith.constant 0 : index
    %5 = vector.load %arg5[%c0_3, %c0_4, %c0_5] : memref<1x8x128xf32, #tpu.memory_space<vmem>>, vector<1x8x128xf32>
    %6 = vector.shape_cast %5 : vector<1x8x128xf32> to vector<8x128xf32>
    %c0_6 = arith.constant 0 : index
    %c0_7 = arith.constant 0 : index
    %7 = vector.load %arg2[%c0_6, %c0_7] : memref<8x128xf32, #tpu.memory_space<vmem>>, vector<8x128xf32>
    %c0_8 = arith.constant 0 : index
    %c0_9 = arith.constant 0 : index
    %8 = vector.load %arg3[%c0_8, %c0_9] : memref<8x128xf32, #tpu.memory_space<vmem>>, vector<8x128xf32>
    %9 = arith.mulf %7, %8 : vector<8x128xf32>
    %10 = arith.addf %4, %9 : vector<8x128xf32>
    %11 = arith.addf %7, %8 : vector<8x128xf32>
    %12 = arith.mulf %11, %11 : vector<8x128xf32>
    %13 = arith.addf %6, %12 : vector<8x128xf32>
    %c0_10 = arith.constant 0 : index
    %c0_11 = arith.constant 0 : index
    %c0_12 = arith.constant 0 : index
    %14 = vector.load %arg4[%c0_10, %c0_11, %c0_12] : memref<1x8x128xf32, #tpu.memory_space<vmem>>, vector<1x8x128xf32>
    %15 = vector.shape_cast %14 : vector<1x8x128xf32> to vector<8x128xf32>
    %16 = vector.shape_cast %10 : vector<8x128xf32> to vector<1x8x128xf32>
    tpu.vector_store %arg4[%c0_10, %c0_11, %c0_12], %16 {strides = array<i32>} : memref<1x8x128xf32, #tpu.memory_space<vmem>>, vector<1x8x128xf32>,
    %c0_13 = arith.constant 0 : index
    %c0_14 = arith.constant 0 : index
    %c0_15 = arith.constant 0 : index
    %17 = vector.load %arg5[%c0_13, %c0_14, %c0_15] : memref<1x8x128xf32, #tpu.memory_space<vmem>>, vector<1x8x128xf32>
    %18 = vector.shape_cast %17 : vector<1x8x128xf32> to vector<8x128xf32>
    %19 = vector.shape_cast %13 : vector<8x128xf32> to vector<1x8x128xf32>
    tpu.vector_store %arg5[%c0_13, %c0_14, %c0_15], %19 {strides = array<i32>} : memref<1x8x128xf32, #tpu.memory_space<vmem>>, vector<1x8x128xf32>,
    return
  }
  func.func @transform_0(%arg0: i32, %arg1: i32) -> (i32, i32) {
    %c1_i32 = arith.constant 1 : i32
    %0 = arith.muli %arg0, %c1_i32 : i32
    %1 = arith.addi %0, %arg1 : i32
    %c0_i32 = arith.constant 0 : i32
    %c0_i32_0 = arith.constant 0 : i32
    return %c0_i32, %1 : i32, i32
  }
  func.func @transform_1(%arg0: i32, %arg1: i32) -> (i32, i32) {
    %c1_i32 = arith.constant 1 : i32
    %0 = arith.muli %arg0, %c1_i32 : i32
    %1 = arith.addi %0, %arg1 : i32
    %c0_i32 = arith.constant 0 : i32
    %c0_i32_0 = arith.constant 0 : i32
    return %c0_i32, %1 : i32, i32
  }
  func.func @transform_2(%arg0: i32, %arg1: i32) -> (i32, i32, i32) {
    %c0_i32 = arith.constant 0 : i32
    %c0_i32_0 = arith.constant 0 : i32
    %c0_i32_1 = arith.constant 0 : i32
    return %arg0, %c0_i32, %c0_i32_0 : i32, i32, i32
  }
  func.func @transform_3(%arg0: i32, %arg1: i32) -> (i32, i32, i32) {
    %c0_i32 = arith.constant 0 : i32
    %c0_i32_0 = arith.constant 0 : i32
    %c0_i32_1 = arith.constant 0 : i32
    return %arg0, %c0_i32, %c0_i32_0 : i32, i32, i32
  }
}

</mosaic_0001>

<llo_original>
// kernel: tpu_custom_call.1
$region0: #{tpu_custom_call.1}
  #allocation0 [shape = 'u32[]', space=smem, size = 0x4, offset = 0x4, fixed_abs, tag = 'smem constant byte address 0x4 - core index']
  #allocation1 [shape = 'u32[144,128]{1,0:T(1,128)}', space=vmem, size = 0x12000, scoped, tag = 'internal scratch']
  %s0 = inlined_call_operand.hbm [shape: f32[8,256], index: 0, kind: input, shape index: {}]
  %s1 = inlined_call_operand.hbm [shape: f32[8,256], index: 1, kind: input, shape index: {}]
  %s2 = inlined_call_operand.hbm [shape: f32[2,8,128], index: 2, kind: output, shape index: {0}]
  %s3 = inlined_call_operand.hbm [shape: f32[2,8,128], index: 3, kind: output, shape index: {1}]
  %4 = xla_tuple %s2, %s3
  %s5 = sld [smem:[#allocation0]]
  $region61: #{tpu_custom_call.1} parent=0
    _
  %s7 = ssub.s32 1, %s5
  %s8 = scalar_select 0, %s7, %s5
  $region1: #{tpu_custom_call.1} parent=0
    #allocation2 [shape = 'u8[8192]{0}', space=vmem, size = 0x2000, scoped, tag = 'input window, operand 0']
    #allocation3 [shape = 's32[2]{0}', space=sflag, size = 0x8, scoped, tag = 'scoped memory for tpu_custom_call.1']
    #allocation4 [shape = 's32[2]{0}', space=sflag, size = 0x8, scoped, tag = 'scoped memory for tpu_custom_call.1']
    #allocation5 [shape = 'u8[8192]{0}', space=vmem, size = 0x2000, scoped, tag = 'input window, operand 1']
    #allocation6 [shape = 's32[2]{0}', space=sflag, size = 0x8, scoped, tag = 'scoped memory for tpu_custom_call.1']
    #allocation7 [shape = 'u8[8192]{0}', space=vmem, size = 0x2000, scoped, tag = 'output window, operand 0']
    #allocation8 [shape = 'u8[8192]{0}', space=vmem, size = 0x2000, scoped, tag = 'output window, operand 1']
    #allocation9 [shape = 's32[2]{0}', space=sflag, size = 0x8, scoped, tag = 'scoped memory for tpu_custom_call.1']
    %9 = vsyncpa [#allocation3], 0
    %s10 = scalar_lea.sflag [#allocation3], 1
    %11 = vsyncpa %s10, 0
    %12 = vsyncpa [#allocation6], 0
    %s13 = scalar_lea.sflag [#allocation6], 1
    %14 = vsyncpa %s13, 0
    %15 = vsyncpa [#allocation4], 0
    %s16 = scalar_lea.sflag [#allocation4], 1
    %17 = vsyncpa %s16, 0
    %18 = vsyncpa [#allocation9], 0
    %s19 = scalar_lea.sflag [#allocation9], 1
    %20 = vsyncpa %s19, 0
    loop: start=0, step=1, limit=4
    $region2: #{tpu_custom_call.1} parent=1 // loop_pre_header
      _
    $region3: #{tpu_custom_call.1} parent=1 // loop_header
      %s22 = sphi 0, %s26
      %p23 = scmp.ge.s32.totalorder %s22, 4
      %s29 = sphi 0, %s41
      %s30 = sphi 0, %s37
      %s31 = sphi 0, %s29
      %s32 = sphi 0, %s30
      %s33 = sphi 0, %s31
      %s34 = sphi 0, %s32
      %s46 = sphi 0, %s48
      %s49 = sphi 0, %s46
      %s50 = sphi 0, %s49
      %s66 = sphi 0, %s50
      %s74 = sphi 0, %s76
      %s77 = sphi 0, %s74
      %s78 = sphi 0, %s77
      %s94 = sphi 0, %s78
      %s100 = sphi 0, %s102
      %s103 = sphi 0, %s100
      %s104 = sphi 0, %s103
      %s120 = sphi 0, %s104
      %s126 = sphi 0, %s128
      %s129 = sphi 0, %s126
      %s130 = sphi 0, %s129
      %s146 = sphi 0, %s130
    $region4: #{tpu_custom_call.1} parent=1 // loop_header_branch
      %25 = sbr.rel (%p23) target = $region8
    $region5: #{tpu_custom_call.1} parent=1 // loop_body
      %s27 = ssub.s32 %s22, 1
      %s28 = ssub.s32 %s22, 2
      %s35 = sadd.s32 1, %s30
      %p36 = scmp.ge.s32.totalorder %s35, 1
      %s37 = scalar_select %p36, 0, %s35
      %s38 = sadd.s32 1, %s29
      %s39 = scalar_select %p36, %s38, %s29
      %p40 = scmp.ge.s32.totalorder %s39, 2
      %s41 = scalar_select %p40, 0, %s39
      %s42 = sadd.s32 %s29, %s30
      %s43 = sadd.s32 %s41, %s37
      %s44 = ssub.s32 %s42, %s43
      %p45 = scmp.eq.s32.totalorder %s44, 0
      %s47 = sadd.s32 %s46, 1
      %s48 = scalar_select %p45, %s46, %s47
      %p51 = pneg %p45
      %p52 = scmp.eq.s32.totalorder %s22, 1
      %p53 = por %p51, %p52
      %p54 = scmp.ne.s32.totalorder %s46, %s49
      %p55 = scmp.eq.s32.totalorder %s22, 0
      %p56 = por %p54, %p55
      %p57 = scmp.ne.s32.totalorder %s46, %s49
      %p58 = scmp.eq.s32.totalorder %s27, 1
      %p59 = por %p57, %p58
      %p60 = scmp.ne.s32.totalorder %s49, %s50
      %p61 = scmp.eq.s32.totalorder %s27, 0
      %p62 = por %p60, %p61
      %p63 = scmp.ne.s32.totalorder %s49, %s50
      %p64 = scmp.eq.s32.totalorder %s28, 1
      %p65 = por %p63, %p64
      %p67 = scmp.ne.s32.totalorder %s50, %s66
      %p68 = scmp.eq.s32.totalorder %s28, 0
      %p69 = por %p67, %p68
      %s70 = sadd.s32 %s29, %s30
      %s71 = sadd.s32 %s41, %s37
      %s72 = ssub.s32 %s70, %s71
      %p73 = scmp.eq.s32.totalorder %s72, 0
      %s75 = sadd.s32 %s74, 1
      %s76 = scalar_select %p73, %s74, %s75
      %p79 = pneg %p73
      %p80 = scmp.eq.s32.totalorder %s22, 1
      %p81 = por %p79, %p80
      %p82 = scmp.ne.s32.totalorder %s74, %s77
      %p83 = scmp.eq.s32.totalorder %s22, 0
      %p84 = por %p82, %p83
      %p85 = scmp.ne.s32.totalorder %s74, %s77
      %p86 = scmp.eq.s32.totalorder %s27, 1
      %p87 = por %p85, %p86
      %p88 = scmp.ne.s32.totalorder %s77, %s78
      %p89 = scmp.eq.s32.totalorder %s27, 0
      %p90 = por %p88, %p89
      %p91 = scmp.ne.s32.totalorder %s77, %s78
      %p92 = scmp.eq.s32.totalorder %s28, 1
      %p93 = por %p91, %p92
      %p95 = scmp.ne.s32.totalorder %s78, %s94
      %p96 = scmp.eq.s32.totalorder %s28, 0
      %p97 = por %p95, %p96
      %s98 = ssub.s32 %s29, %s41
      %p99 = scmp.eq.s32.totalorder %s98, 0
      %s101 = sadd.s32 %s100, 1
      %s102 = scalar_select %p99, %s100, %s101
      %p105 = pneg %p99
      %p106 = scmp.eq.s32.totalorder %s22, 1
      %p107 = por %p105, %p106
      %p108 = scmp.ne.s32.totalorder %s100, %s103
      %p109 = scmp.eq.s32.totalorder %s22, 0
      %p110 = por %p108, %p109
      %p111 = scmp.ne.s32.totalorder %s100, %s103
      %p112 = scmp.eq.s32.totalorder %s27, 1
      %p113 = por %p111, %p112
      %p114 = scmp.ne.s32.totalorder %s103, %s104
      %p115 = scmp.eq.s32.totalorder %s27, 0
      %p116 = por %p114, %p115
      %p117 = scmp.ne.s32.totalorder %s103, %s104
      %p118 = scmp.eq.s32.totalorder %s28, 1
      %p119 = por %p117, %p118
      %p121 = scmp.ne.s32.totalorder %s104, %s120
      %p122 = scmp.eq.s32.totalorder %s28, 0
      %p123 = por %p121, %p122
      %s124 = ssub.s32 %s29, %s41
      %p125 = scmp.eq.s32.totalorder %s124, 0
      %s127 = sadd.s32 %s126, 1
      %s128 = scalar_select %p125, %s126, %s127
      %p131 = pneg %p125
      %p132 = scmp.eq.s32.totalorder %s22, 1
      %p133 = por %p131, %p132
      %p134 = scmp.ne.s32.totalorder %s126, %s129
      %p135 = scmp.eq.s32.totalorder %s22, 0
      %p136 = por %p134, %p135
      %p137 = scmp.ne.s32.totalorder %s126, %s129
      %p138 = scmp.eq.s32.totalorder %s27, 1
      %p139 = por %p137, %p138
      %p140 = scmp.ne.s32.totalorder %s129, %s130
      %p141 = scmp.eq.s32.totalorder %s27, 0
      %p142 = por %p140, %p141
      %p143 = scmp.ne.s32.totalorder %s129, %s130
      %p144 = scmp.eq.s32.totalorder %s28, 1
      %p145 = por %p143, %p144
      %p147 = scmp.ne.s32.totalorder %s130, %s146
      %p148 = scmp.eq.s32.totalorder %s28, 0
      %p149 = por %p147, %p148
      %p150 = scmp.le.s32.totalorder 1, %s22
      %p151 = scmp.lt.s32.totalorder %s22, 3
      %p152 = pnand %p150, %p151
      %p153 = pneg %p152
      // Predicated region
      $region9: #{tpu_custom_call.1} parent=5 // pred_check
        _
      $region10: #{tpu_custom_call.1} parent=5 // pred_check_branch
        %155 = sbr.rel (%p152) target = $region12
      $region11: #{tpu_custom_call.1} parent=5 // pred_region
        %s156 = ssub.s32 %s22, 1
      $region12: #{tpu_custom_call.1} parent=5 // pred_fallthru
        _
      %p157 = scmp.lt.s32.totalorder %s22, 2
      // Predicated region
      $region13: #{tpu_custom_call.1} parent=5 // pred_check
        %p158 = pneg %p157
      $region14: #{tpu_custom_call.1} parent=5 // pred_check_branch
        %160 = sbr.rel (%p158) target = $region16
      $region15: #{tpu_custom_call.1} parent=5 // pred_region
        // Predicated region
        $region17: #{tpu_custom_call.1} parent=15 // pred_check
          %p161 = pneg %p56
        $region18: #{tpu_custom_call.1} parent=15 // pred_check_branch
          %163 = sbr.rel (%p161) target = $region20
        $region19: #{tpu_custom_call.1} parent=15 // pred_region
          %s164 = sand.u32 %s46, 1
          %s165 = scalar_lea.sflag [#allocation3], %s164
          %s166 = sand.u32 %s46, 1
          %s167 = smul.addr %s166, 8
          %s168 = scalar_lea.vmem [#allocation2], %s167
          %s169 = sadd.s32 %s29, %s30
          %s171 = ssub.s32 128, 128
          %172 = vsyncadd %s165, %s171
          %s173 = smul.addr %s169, 128
          %s174 = scalar_lea.hbm %s0, %s173
          %s176 = sshll.u32 %s168, 4
          %s177 = int_to_ptr.vmem [resolvable:$true] %s176
          %179 = dma.hbm_to_vmem [thread:$0]  %s174, 128, %s177, %s165
        $region20: #{tpu_custom_call.1} parent=15 // pred_fallthru
          _
        // Predicated region
        $region21: #{tpu_custom_call.1} parent=15 // pred_check
          %p180 = pneg %p84
        $region22: #{tpu_custom_call.1} parent=15 // pred_check_branch
          %182 = sbr.rel (%p180) target = $region24
        $region23: #{tpu_custom_call.1} parent=15 // pred_region
          %s183 = sand.u32 %s74, 1
          %s184 = scalar_lea.sflag [#allocation6], %s183
          %s185 = sand.u32 %s74, 1
          %s186 = smul.addr %s185, 8
          %s187 = scalar_lea.vmem [#allocation5], %s186
          %s188 = sadd.s32 %s29, %s30
          %s190 = ssub.s32 128, 128
          %191 = vsyncadd %s184, %s190
          %s192 = smul.addr %s188, 128
          %s193 = scalar_lea.hbm %s1, %s192
          %s195 = sshll.u32 %s187, 4
          %s196 = int_to_ptr.vmem [resolvable:$true] %s195
          %198 = dma.hbm_to_vmem [thread:$0]  %s193, 128, %s196, %s184
        $region24: #{tpu_custom_call.1} parent=15 // pred_fallthru
          _
      $region16: #{tpu_custom_call.1} parent=5 // pred_fallthru
        _
      %p199 = scmp.le.s32.totalorder 1, %s22
      %p200 = scmp.lt.s32.totalorder %s22, 3
      %p201 = pnand %p199, %p200
      %p202 = pneg %p201
      // Predicated region
      $region25: #{tpu_custom_call.1} parent=5 // pred_check
        _
      $region26: #{tpu_custom_call.1} parent=5 // pred_check_branch
        %204 = sbr.rel (%p201) target = $region28
      $region27: #{tpu_custom_call.1} parent=5 // pred_region
        %s205 = ssub.s32 %s22, 1
        %s206 = sand.u32 %s49, 1
        %s207 = scalar_lea.sflag [#allocation3], %s206
        %s208 = sand.u32 %s49, 1
        %s209 = smul.addr %s208, 8
        %s210 = scalar_lea.vmem [#allocation2], %s209
        // Predicated region
        $region29: #{tpu_custom_call.1} parent=27 // pred_check
          %p211 = pneg %p62
        $region30: #{tpu_custom_call.1} parent=27 // pred_check_branch
          %213 = sbr.rel (%p211) target = $region32
        $region31: #{tpu_custom_call.1} parent=27 // pred_region
          %214 = dma.done %s207, 128
        $region32: #{tpu_custom_call.1} parent=27 // pred_fallthru
          _
        %s215 = sand.u32 %s77, 1
        %s216 = scalar_lea.sflag [#allocation6], %s215
        %s217 = sand.u32 %s77, 1
        %s218 = smul.addr %s217, 8
        %s219 = scalar_lea.vmem [#allocation5], %s218
        // Predicated region
        $region33: #{tpu_custom_call.1} parent=27 // pred_check
          %p220 = pneg %p90
        $region34: #{tpu_custom_call.1} parent=27 // pred_check_branch
          %222 = sbr.rel (%p220) target = $region36
        $region35: #{tpu_custom_call.1} parent=27 // pred_region
          %223 = dma.done %s216, 128
        $region36: #{tpu_custom_call.1} parent=27 // pred_fallthru
          _
        %s224 = sand.u32 %s49, 1
        %s225 = scalar_lea.sflag [#allocation3], %s224
        %s226 = sand.u32 %s49, 1
        %s227 = smul.addr %s226, 8
        %s228 = scalar_lea.vmem [#allocation2], %s227
        %p229 = pneg %p62
        %p230 = pneg %p59
        %s231 = sand.u32 %s77, 1
        %s232 = scalar_lea.sflag [#allocation6], %s231
        %s233 = sand.u32 %s77, 1
        %s234 = smul.addr %s233, 8
        %s235 = scalar_lea.vmem [#allocation5], %s234
        %p236 = pneg %p90
        %p237 = pneg %p87
        %p238 = pneg %p116
        %p239 = pneg %p113
        %s240 = sand.u32 %s103, 1
        %s241 = scalar_lea.sflag [#allocation4], %s240
        %s242 = sand.u32 %s103, 1
        %s243 = smul.addr %s242, 8
        %s244 = scalar_lea.vmem [#allocation7], %s243
        %p245 = pneg %p142
        %p246 = pneg %p139
        %s247 = sand.u32 %s129, 1
        %s248 = scalar_lea.sflag [#allocation9], %s247
        %s249 = sand.u32 %s129, 1
        %s250 = smul.addr %s249, 8
        %s251 = scalar_lea.vmem [#allocation8], %s250
        %s252 = sadd.s32 %s31, %s32
        %s253 = sadd.s32 %s31, %s32
        %p254 = scmp.eq.s32.totalorder %s32, 0
        // Predicated region
        $region37: #{tpu_custom_call.1} parent=27 // pred_check
          %p255 = pneg %p254
        $region38: #{tpu_custom_call.1} parent=27 // pred_check_branch
          %257 = sbr.rel (%p255) target = $region40
        $region39: #{tpu_custom_call.1} parent=27 // pred_region
          %258 = vst [vmem:[%s244] sm:$0xff] 0.0
          %259 = vst [vmem:[%s251] sm:$0xff] 0.0
        $region40: #{tpu_custom_call.1} parent=27 // pred_fallthru
          _
        %v260 = vld [vmem:[%s244] sm:$0xff]
        %v261 = vld [vmem:[%s251] sm:$0xff]
        %v262 = vld [vmem:[%s210] sm:$0xff]
        %v263 = vld [vmem:[%s219] sm:$0xff]
        %v264 = vmul.f32 %v262, %v263
        %v265 = vadd.f32 %v260, %v264
        %v266 = vadd.f32 %v262, %v263
        %v267 = vmul.f32 %v266, %v266
        %v268 = vadd.f32 %v261, %v267
        %269 = vst [vmem:[%s244] sm:$0xff] %v265
        %270 = vst [vmem:[%s251] sm:$0xff] %v268
        %s271 = sand.u32 %s103, 1
        %s272 = scalar_lea.sflag [#allocation4], %s271
        %s273 = sand.u32 %s103, 1
        %s274 = smul.addr %s273, 8
        %s275 = scalar_lea.vmem [#allocation7], %s274
        %s276 = sand.u32 %s129, 1
        %s277 = scalar_lea.sflag [#allocation9], %s276
        %s278 = sand.u32 %s129, 1
        %s279 = smul.addr %s278, 8
        %s280 = scalar_lea.vmem [#allocation8], %s279
        // Predicated region
        $region41: #{tpu_custom_call.1} parent=27 // pred_check
          %p281 = pneg %p113
        $region42: #{tpu_custom_call.1} parent=27 // pred_check_branch
          %283 = sbr.rel (%p281) target = $region44
        $region43: #{tpu_custom_call.1} parent=27 // pred_region
          %s285 = ssub.s32 128, 128
          %286 = vsyncadd %s272, %s285
          %s287 = smul.addr %s31, 128
          %s288 = scalar_lea.hbm %s2, %s287
          %s290 = sshll.u32 %s275, 4
          %s291 = int_to_ptr.vmem [resolvable:$true] %s290
          %293 = dma.vmem_to_hbm [thread:$0]  %s291, 128, %s288, %s272
        $region44: #{tpu_custom_call.1} parent=27 // pred_fallthru
          _
        // Predicated region
        $region45: #{tpu_custom_call.1} parent=27 // pred_check
          %p294 = pneg %p139
        $region46: #{tpu_custom_call.1} parent=27 // pred_check_branch
          %296 = sbr.rel (%p294) target = $region48
        $region47: #{tpu_custom_call.1} parent=27 // pred_region
          %s298 = ssub.s32 128, 128
          %299 = vsyncadd %s277, %s298
          %s300 = smul.addr %s31, 128
          %s301 = scalar_lea.hbm %s3, %s300
          %s303 = sshll.u32 %s280, 4
          %s304 = int_to_ptr.vmem [resolvable:$true] %s303
          %306 = dma.vmem_to_hbm [thread:$0]  %s304, 128, %s301, %s277
        $region48: #{tpu_custom_call.1} parent=27 // pred_fallthru
          _
      $region28: #{tpu_custom_call.1} parent=5 // pred_fallthru
        _
      %p307 = scmp.le.s32.totalorder 2, %s22
      // Predicated region
      $region49: #{tpu_custom_call.1} parent=5 // pred_check
        %p308 = pneg %p307
      $region50: #{tpu_custom_call.1} parent=5 // pred_check_branch
        %310 = sbr.rel (%p308) target = $region52
      $region51: #{tpu_custom_call.1} parent=5 // pred_region
        %s311 = ssub.s32 %s22, 2
        // Predicated region
        $region53: #{tpu_custom_call.1} parent=51 // pred_check
          %p312 = pneg %p119
        $region54: #{tpu_custom_call.1} parent=51 // pred_check_branch
          %314 = sbr.rel (%p312) target = $region56
        $region55: #{tpu_custom_call.1} parent=51 // pred_region
          %s315 = sand.u32 %s104, 1
          %s316 = scalar_lea.sflag [#allocation4], %s315
          %s317 = sand.u32 %s104, 1
          %s318 = smul.addr %s317, 8
          %s319 = scalar_lea.vmem [#allocation7], %s318
          %320 = dma.done %s316, 128
        $region56: #{tpu_custom_call.1} parent=51 // pred_fallthru
          _
        // Predicated region
        $region57: #{tpu_custom_call.1} parent=51 // pred_check
          %p321 = pneg %p145
        $region58: #{tpu_custom_call.1} parent=51 // pred_check_branch
          %323 = sbr.rel (%p321) target = $region60
        $region59: #{tpu_custom_call.1} parent=51 // pred_region
          %s324 = sand.u32 %s130, 1
          %s325 = scalar_lea.sflag [#allocation9], %s324
          %s326 = sand.u32 %s130, 1
          %s327 = smul.addr %s326, 8
          %s328 = scalar_lea.vmem [#allocation8], %s327
          %329 = dma.done %s325, 128
        $region60: #{tpu_custom_call.1} parent=51 // pred_fallthru
          _
      $region52: #{tpu_custom_call.1} parent=5 // pred_fallthru
        _
    $region6: #{tpu_custom_call.1} parent=1 // loop_footer
      %s26 = sadd.s32 1, %s22
    $region7: #{tpu_custom_call.1} parent=1 // loop_footer_branch
      %21 = sbr.rel target = $region3
    $region8: #{tpu_custom_call.1} parent=1 // loop_exit
      _
    %330 = vsyncpa [#allocation3], 1
    %s331 = scalar_lea.sflag [#allocation3], 1
    %332 = vsyncpa %s331, 1
    %333 = vsyncpa [#allocation6], 1
    %s334 = scalar_lea.sflag [#allocation6], 1
    %335 = vsyncpa %s334, 1
    %336 = vsyncpa [#allocation4], 1
    %s337 = scalar_lea.sflag [#allocation4], 1
    %338 = vsyncpa %s337, 1
    %339 = vsyncpa [#allocation9], 1
    %s340 = scalar_lea.sflag [#allocation9], 1
    %341 = vsyncpa %s340, 1

</llo_original>
